<compile_context>
chip_gen: v7x
topology: tpu7x:2x2x1
jax: 0.10.0
libtpu: 0.0.40
codegen_flags: <defaults>
</compile_context>

<pallas_src>
import math

import jax
import jax.numpy as jnp
from jax.experimental import pallas as pl
from jax.experimental.pallas import tpu as pltpu


# ----------------------------------------------------------------------------
# Host-side helpers
# ----------------------------------------------------------------------------
def _build_pe_table(max_len: int, d_model: int, dtype=jnp.float32) -> jnp.ndarray:
    """Deterministic sin/cos positional-encoding table, shape (max_len, d_model)."""
    position = jnp.arange(max_len, dtype=jnp.float32)[:, None]
    div_term = jnp.exp(
        jnp.arange(0, d_model, 2, dtype=jnp.float32) * (-math.log(10000.0) / d_model))
    pe = jnp.zeros((max_len, d_model), dtype=jnp.float32)
    pe = pe.at[:, 0::2].set(jnp.sin(position * div_term))
    pe = pe.at[:, 1::2].set(jnp.cos(position * div_term))
    return pe.astype(dtype)


def _sublane_multiple(dtype) -> int:
    """Sublane rounding: 8 for 4-byte, 16 for 2-byte, 32 for 1-byte dtypes."""
    itemsize = jnp.dtype(dtype).itemsize
    return 8 * max(1, 4 // itemsize)


def _choose_pe_width(E: int, N: int, cap: int = 2048) -> int:
    """Lane width of the pre-widened PE table (a multiple of E that divides N*E).

    Prefer the smallest 128-aligned multiple of E (dense unmasked column-chunk
    stores with minimal extra PE HBM traffic); otherwise fall back to the widest
    divisor width under `cap` (fewest chunk ops)."""
    best = E
    for k in range(1, N + 1):
        if N % k:
            continue
        w = k * E
        if w % 128 == 0:
            return w            # smallest 128-aligned width
        if w <= cap:
            best = w
    return best


# ----------------------------------------------------------------------------
# Kernel
# ----------------------------------------------------------------------------
def _pe_add_kernel(x_ref, pe_ref, o_ref):
    """x_ref/o_ref: (tl, Wcol) blocks of the lane-dense input/output.
    pe_ref: (tl, Wpe) float32 PE rows, Wcol % Wpe == 0; the PE pattern repeats
    every Wpe lanes, so one PE load serves every column chunk."""
    wpe = pe_ref.shape[-1]
    n_chunks = o_ref.shape[-1] // wpe
    pe = pe_ref[...]                                    # float32, read once
    for c in range(n_chunks):                           # short static unroll
        sl = slice(c * wpe, (c + 1) * wpe)              # 128-aligned chunk starts
        o_ref[:, sl] = (x_ref[:, sl].astype(jnp.float32) + pe).astype(o_ref.dtype)


# ----------------------------------------------------------------------------
# Wrapper
# ----------------------------------------------------------------------------
def positional_encoding(x: jnp.ndarray, pe_table: jnp.ndarray, *,
                        tl: int | None = None,
                        donate_input: bool = False) -> jnp.ndarray:
    """Eval-mode PositionalEncoding.forward: x (L, N, E) -> x + pe[:L] broadcast over N."""
    L, N, E = x.shape
    max_len, e_pe = pe_table.shape
    assert e_pe == E, "pe_table feature dim must match x"
    assert L <= max_len, "sequence length exceeds positional-encoding table"

    dtype = x.dtype
    itemsize = jnp.dtype(dtype).itemsize
    sub = _sublane_multiple(dtype)
    row = N * E
    pe_f32 = pe_table.astype(jnp.float32)

    # ---- layout: fold sequence rows into lanes when a row is lane-sparse ----
    g = 1
    if row < 128:
        gg = math.lcm(row, 128) // row
        if gg > 1 and L % gg == 0:
            g = gg
    R, C = L // g, g * row
    x2 = x.reshape(R, C)                       # free: row-major contiguous view

    # ---- PE lane width ----
    if g > 1:
        wpe = C                                # folded PE has no sub-row period
    else:
        wpe = _choose_pe_width(E, N)

    # ---- tile sizes ----
    single_block_bytes = 4 * 1024 * 1024       # below this: one step, no split
    target_block_bytes = 3 * 1024 * 1024       # ~3 MiB x/out blocks when split
    total_bytes = R * C * itemsize

    wcol = C
    if tl is not None:
        tl = int(min(tl, R))                   # caller override (sublane multiple)
    elif total_bytes <= single_block_bytes:
        tl = R                                 # single step: no per-step overhead
    elif sub * C * itemsize > 4 * target_block_bytes:
        # extremely wide rows (v7x 64 MiB VMEM hazard): tile the lane dim too
        base = math.lcm(wpe, 128)
        wcol = max(base, (target_block_bytes // (sub * itemsize)) // base * base)
        tl = min(sub, R)
    else:
        tl = max(sub, (target_block_bytes // (C * itemsize)) // sub * sub)
        if tl >= R:
            tl = R
        else:
            nrow = pl.cdiv(R, tl)
            if nrow % 2 == 1:                  # even step count -> both v7x TCs busy
                cand = max(sub, pl.cdiv(pl.cdiv(R, nrow + 1), sub) * sub)
                if cand < R and pl.cdiv(R, cand) % 2 == 0:
                    tl = cand

    # keep the static column-chunk unroll short (PE stays tiny either way)
    while wcol // wpe > 16 and wcol % (2 * wpe) == 0:
        wpe *= 2

    # ---- host-side PE prep: small (R x wpe) float32 table ----
    if g > 1:
        pe_prep = jnp.tile(pe_f32[:L], (1, N)).reshape(R, C)
    else:
        pe_prep = jnp.tile(pe_f32[:R], (1, wpe // E))

    grid = (pl.cdiv(R, tl), pl.cdiv(C, wcol))

    # ---- compiler params: never lower the scoped-VMEM default ----
    est_vmem = 4 * tl * wcol * itemsize + 2 * tl * wpe * 4   # 2x(x)+2x(out)+2x(pe)
    cparams = dict(dimension_semantics=("parallel", "parallel"))
    if est_vmem * 1.25 > 16 * 1024 * 1024:
        cparams["vmem_limit_bytes"] = int(max(est_vmem * 1.25, 32 * 1024 * 1024))

    cost = pl.CostEstimate(
        flops=R * C,
        transcendentals=0,
        bytes_accessed=2 * R * C * itemsize + R * wpe * 4,
    )

    extra = {}
    if donate_input:
        # Only saves an HBM buffer if the caller also donates x at the jit boundary.
        extra["input_output_aliases"] = {0: 0}

    out2 = pl.pallas_call(
        _pe_add_kernel,
        out_shape=jax.ShapeDtypeStruct((R, C), dtype),
        grid_spec=pltpu.PrefetchScalarGridSpec(
            num_scalar_prefetch=0,
            grid=grid,
            in_specs=[
                pl.BlockSpec((tl, wcol), lambda i, j: (i, j)),   # x, lane-dense
                pl.BlockSpec((tl, wpe), lambda i, j: (i, 0)),    # narrow PE rows
            ],
            out_specs=pl.BlockSpec((tl, wcol), lambda i, j: (i, j)),
        ),
        compiler_params=pltpu.CompilerParams(**cparams),
        cost_estimate=cost,
        **extra,
    )(x2, pe_prep)
    return out2.reshape(L, N, E)


# ----------------------------------------------------------------------------
# Self-test
# ----------------------------------------------------------------------------
if __name__ == "__main__":
    # 1) Shipped toy config (L=8, N=2, E=32): folded lane-dense path, single block.
    L, N, E = 8, 2, 32
    MAX_LEN = 64
    x = jax.random.normal(jax.random.PRNGKey(0), (L, N, E), dtype=jnp.float32)
    pe_table = _build_pe_table(MAX_LEN, E)
    out = jax.block_until_ready(positional_encoding(x, pe_table))
    ref = x + pe_table[:L][:, None, :]
    assert out.shape == (L, N, E)
    assert jnp.allclose(out, ref, atol=1e-6), "mismatch (folded path)"

    # 2) Ragged / unfoldable sequence length (L = max_len - 1, odd): unfolded path.
    L2 = MAX_LEN - 1
    x2 = jax.random.normal(jax.random.PRNGKey(1), (L2, N, E), dtype=jnp.float32)
    out2 = jax.block_until_ready(positional_encoding(x2, pe_table))
    ref2 = x2 + pe_table[:L2][:, None, :]
    assert jnp.allclose(out2, ref2, atol=1e-6), "mismatch (unfolded path)"

    # 3) Multi-step grid + column-chunked PE (tl override forces 4 row blocks).
    L3, N3, E3 = 64, 4, 64
    pe_table3 = _build_pe_table(128, E3)
    x3 = jax.random.normal(jax.random.PRNGKey(2), (L3, N3, E3), dtype=jnp.float32)
    out3 = jax.block_until_ready(positional_encoding(x3, pe_table3, tl=16))
    ref3 = x3 + pe_table3[:L3][:, None, :]
    assert jnp.allclose(out3, ref3, atol=1e-6), "mismatch (multi-block path)"

    print("KERNEL_OK")
</pallas_src>

<mosaic_0001>
module attributes {stable_mosaic.version = 11 : i64} {
  func.func @_pe_add_kernel(%arg0: i32, %arg1: i32, %arg2: memref<4x128xf32, #tpu.memory_space<vmem>>, %arg3: memref<4x128xf32, #tpu.memory_space<vmem>>, %arg4: memref<4x128xf32, #tpu.memory_space<vmem>>) attributes {dimension_semantics = [#tpu.dimension_semantics<parallel>, #tpu.dimension_semantics<parallel>], iteration_bounds = array<i64: 1, 1>, scalar_prefetch = 0 : i64, scratch_operands = 0 : i64, tpu.core_type = #tpu.core_type<tc>, window_params = [{transform_indices = @transform_0, window_bounds = array<i64: 4, 128>}, {transform_indices = @transform_1, window_bounds = array<i64: 4, 128>}, {transform_indices = @transform_2, window_bounds = array<i64: 4, 128>}]} {
    %c0 = arith.constant 0 : index
    %c0_0 = arith.constant 0 : index
    %0 = vector.load %arg3[%c0, %c0_0] : memref<4x128xf32, #tpu.memory_space<vmem>>, vector<4x128xf32>
    %c0_1 = arith.constant 0 : index
    %c0_2 = arith.constant 0 : index
    %1 = vector.load %arg2[%c0_1, %c0_2] : memref<4x128xf32, #tpu.memory_space<vmem>>, vector<4x128xf32>
    %2 = arith.addf %1, %0 : vector<4x128xf32>
    %c0_3 = arith.constant 0 : index
    %c0_4 = arith.constant 0 : index
    %3 = vector.load %arg4[%c0_3, %c0_4] : memref<4x128xf32, #tpu.memory_space<vmem>>, vector<4x128xf32>
    tpu.vector_store %arg4[%c0_3, %c0_4], %2 {strides = array<i32>} : memref<4x128xf32, #tpu.memory_space<vmem>>, vector<4x128xf32>,
    return
  }
  func.func @transform_0(%arg0: i32, %arg1: i32) -> (i32, i32) {
    %c0_i32 = arith.constant 0 : i32
    return %arg0, %arg1 : i32, i32
  }
  func.func @transform_1(%arg0: i32, %arg1: i32) -> (i32, i32) {
    %c0_i32 = arith.constant 0 : i32
    %c0_i32_0 = arith.constant 0 : i32
    return %arg0, %c0_i32 : i32, i32
  }
  func.func @transform_2(%arg0: i32, %arg1: i32) -> (i32, i32) {
    %c0_i32 = arith.constant 0 : i32
    return %arg0, %arg1 : i32, i32
  }
}

</mosaic_0001>

<llo_original>
// kernel: tpu_custom_call.1
$region0: #{tpu_custom_call.1}
  #allocation0 [shape = 'u32[]', space=smem, size = 0x4, offset = 0x4, fixed_abs, tag = 'smem constant byte address 0x4 - core index']
  #allocation1 [shape = 'u32[144,128]{1,0:T(1,128)}', space=vmem, size = 0x12000, scoped, tag = 'internal scratch']
  %s0 = inlined_call_operand.hbm [shape: f32[4,128], index: 0, kind: input, shape index: {}]
  %s1 = inlined_call_operand.hbm [shape: f32[4,128], index: 1, kind: input, shape index: {}]
  %s2 = inlined_call_operand.hbm [shape: f32[4,128], index: 2, kind: output, shape index: {}]
  %s3 = sld [smem:[#allocation0]]
  $region26: #{tpu_custom_call.1} parent=0
    _
  %s5 = ssub.s32 1, %s3
  %s6 = scalar_select 0, %s5, %s3
  $region1: #{tpu_custom_call.1} parent=0
    #allocation2 [shape = 'u8[2048]{0}', space=vmem, size = 0x800, scoped, tag = 'input window, operand 0, single buffered']
    #allocation3 [shape = 's32[1]{0}', space=sflag, size = 0x4, scoped, tag = 'scoped memory for tpu_custom_call.1']
    #allocation4 [shape = 's32[1]{0}', space=sflag, size = 0x4, scoped, tag = 'scoped memory for tpu_custom_call.1']
    #allocation5 [shape = 'u8[2048]{0}', space=vmem, size = 0x800, scoped, tag = 'input window, operand 1, single buffered']
    #allocation6 [shape = 's32[1]{0}', space=sflag, size = 0x4, scoped, tag = 'scoped memory for tpu_custom_call.1']
    #allocation7 [shape = 'u8[2048]{0}', space=vmem, size = 0x800, scoped, tag = 'output window, operand 0, single buffered']
    %7 = vsyncpa [#allocation3], 0
    %8 = vsyncpa [#allocation6], 0
    %9 = vsyncpa [#allocation4], 0
    // Predicated region
    $region2: #{tpu_custom_call.1} parent=1 // pred_check
      _
    $region3: #{tpu_custom_call.1} parent=1 // pred_check_branch
      %11 = sbr.rel (0) target = $region5
    $region4: #{tpu_custom_call.1} parent=1 // pred_region
      %s13 = ssub.s32 64, 64
      %14 = vsyncadd [#allocation3], %s13
      %s16 = sshll.u32 [#allocation2], 4
      %s17 = int_to_ptr.vmem [resolvable:$true] %s16
      %19 = dma.hbm_to_vmem [thread:$0]  %s0, 64, %s17, [#allocation3]
    $region5: #{tpu_custom_call.1} parent=1 // pred_fallthru
      _
    // Predicated region
    $region6: #{tpu_custom_call.1} parent=1 // pred_check
      _
    $region7: #{tpu_custom_call.1} parent=1 // pred_check_branch
      %21 = sbr.rel (0) target = $region9
    $region8: #{tpu_custom_call.1} parent=1 // pred_region
      %s23 = ssub.s32 64, 64
      %24 = vsyncadd [#allocation6], %s23
      %s26 = sshll.u32 [#allocation5], 4
      %s27 = int_to_ptr.vmem [resolvable:$true] %s26
      %29 = dma.hbm_to_vmem [thread:$0]  %s1, 64, %s27, [#allocation6]
    $region9: #{tpu_custom_call.1} parent=1 // pred_fallthru
      _
    // Predicated region
    $region10: #{tpu_custom_call.1} parent=1 // pred_check
      _
    $region11: #{tpu_custom_call.1} parent=1 // pred_check_branch
      %31 = sbr.rel (0) target = $region13
    $region12: #{tpu_custom_call.1} parent=1 // pred_region
      %32 = dma.done [#allocation3], 64
    $region13: #{tpu_custom_call.1} parent=1 // pred_fallthru
      _
    // Predicated region
    $region14: #{tpu_custom_call.1} parent=1 // pred_check
      _
    $region15: #{tpu_custom_call.1} parent=1 // pred_check_branch
      %34 = sbr.rel (0) target = $region17
    $region16: #{tpu_custom_call.1} parent=1 // pred_region
      %35 = dma.done [#allocation6], 64
    $region17: #{tpu_custom_call.1} parent=1 // pred_fallthru
      _
    %v36 = vld [vmem:[#allocation5] sm:$0xf]
    %v37 = vld [vmem:[#allocation2] sm:$0xf]
    %v38 = vadd.f32 %v37, %v36
    %39 = vst [vmem:[#allocation7] sm:$0xf] %v38
    // Predicated region
    $region18: #{tpu_custom_call.1} parent=1 // pred_check
      _
    $region19: #{tpu_custom_call.1} parent=1 // pred_check_branch
      %41 = sbr.rel (0) target = $region21
    $region20: #{tpu_custom_call.1} parent=1 // pred_region
      %s43 = ssub.s32 64, 64
      %44 = vsyncadd [#allocation4], %s43
      %s46 = sshll.u32 [#allocation7], 4
      %s47 = int_to_ptr.vmem [resolvable:$true] %s46
      %49 = dma.vmem_to_hbm [thread:$0]  %s47, 64, %s2, [#allocation4]
    $region21: #{tpu_custom_call.1} parent=1 // pred_fallthru
      _
    // Predicated region
    $region22: #{tpu_custom_call.1} parent=1 // pred_check
      _
    $region23: #{tpu_custom_call.1} parent=1 // pred_check_branch
      %51 = sbr.rel (0) target = $region25
    $region24: #{tpu_custom_call.1} parent=1 // pred_region
      %52 = dma.done [#allocation4], 64
    $region25: #{tpu_custom_call.1} parent=1 // pred_fallthru
      _
    %53 = vsyncpa [#allocation3], 1
    %54 = vsyncpa [#allocation6], 1
    %55 = vsyncpa [#allocation4], 1

</llo_original>
